<compile_context>
chip_gen: v7x
topology: tpu7x:2x2x1
jax: 0.10.0
libtpu: 0.0.40
codegen_flags: <defaults>
</compile_context>

<pallas_src>
import functools

import numpy as np
import jax
import jax.numpy as jnp
from jax.experimental import pallas as pl
from jax.experimental.pallas import tpu as pltpu


def _temporal_base_kernel(x_ref, params_ref, w_ref, o_ref):
    # x_ref:      (tile_m, C)           frame-major activation tile (f32 or bf16 in HBM)
    # params_ref: (2, C)        f32     row 0 = fused BN scale, row 1 = fused BN shift
    # w_ref:      (C+1, Cout_pad)       rows 0..C-1 = 1x1-conv weight^T, row C = bias
    # o_ref:      (tile_m, Cout_pad)    f32
    p = params_ref[...]
    scale = p[0:1, :]                                    # (1, C)
    shift = p[1:2, :]                                    # (1, C)
    # BatchNorm1d (eval, fused) -> ReLU; Dropout in eval mode is identity.
    # Upcast to f32 in-register (v5e VPU has no bf16); extra casts hide under HBM bound.
    x = x_ref[...].astype(jnp.float32)
    h = jnp.maximum(x * scale + shift, 0.0)              # (tile_m, C)
    w = w_ref[...].astype(jnp.float32)                   # (C+1, Cout_pad)
    # 1x1 conv == per-frame dense: single MXU dot per frames tile; bias folded as last row.
    y = jnp.dot(h, w[:-1, :], preferred_element_type=jnp.float32)
    o_ref[...] = (y + w[-1:, :]).astype(o_ref.dtype)     # one fused store per tile


def _tile_policy():
    """Generation-aware (tile-row cap, vmem_limit_bytes)."""
    try:
        kind = jax.devices()[0].device_kind.lower()
    except Exception:
        kind = ""
    if "v7" in kind:
        return 1024, 48 * 1024 * 1024          # v7x: 64 MiB physical VMEM, keep headroom
    if "v5 lite" in kind or "v5e" in kind or "v6" in kind:
        return 2048, 96 * 1024 * 1024          # v5e/v6e: 128 MiB physical VMEM
    return 1024, 32 * 1024 * 1024              # unknown generation: conservative


def _choose_tile_m(M, C, c_out_pad, x_itemsize, cap, vmem_limit):
    """Pick a frames-tile size: big (HBM roofline), >=2 tiles when possible (v7x megacore),
    multiple of 8 (sublane), and within the scoped-VMEM budget with double buffering."""
    if M <= 8:
        return M                                   # full-extent block is always legal
    half = ((-(-M // 2)) + 7) // 8 * 8             # round_up(ceil(M/2), 8) -> grid >= 2
    tile = min(cap, half)
    per_row = C * x_itemsize + c_out_pad * 4       # in + out bytes per frame
    budget_rows = max(8, (vmem_limit // 2) // (2 * per_row))   # 2 buffers, ~50% of limit
    budget_rows = (budget_rows // 8) * 8
    return max(8, min(tile, budget_rows))


@functools.partial(
    jax.jit,
    static_argnames=("num_joints_out", "c_out_pad", "tile_m", "vmem_limit", "hbm_dtype"))
def _forward_jit(x, params, w_aug, *, num_joints_out, c_out_pad, tile_m,
                 vmem_limit, hbm_dtype):
    B, T, J, F = x.shape
    C = J * F
    M = B * T
    c_out = num_joints_out * 3

    # Free row-major reshape; optional bf16 cast halves HBM read traffic.
    x_mc = x.reshape(M, C).astype(hbm_dtype)

    grid = (pl.cdiv(M, tile_m),)
    itemsize = np.dtype(hbm_dtype).itemsize
    cost = pl.CostEstimate(
        flops=2 * M * C * c_out_pad,
        transcendentals=0,
        bytes_accessed=(M * C * itemsize + M * c_out_pad * 4
                        + (C + 1) * c_out_pad * itemsize + 2 * C * 4))

    y = pl.pallas_call(
        _temporal_base_kernel,
        out_shape=jax.ShapeDtypeStruct((M, c_out_pad), jnp.float32),
        grid_spec=pltpu.PrefetchScalarGridSpec(
            num_scalar_prefetch=0,
            grid=grid,
            in_specs=[
                pl.BlockSpec((tile_m, C), lambda i: (i, 0)),
                pl.BlockSpec((2, C), lambda i: (0, 0)),
                pl.BlockSpec((C + 1, c_out_pad), lambda i: (0, 0)),
            ],
            out_specs=pl.BlockSpec((tile_m, c_out_pad), lambda i: (i, 0)),
        ),
        compiler_params=pltpu.CompilerParams(
            dimension_semantics=("parallel",),
            vmem_limit_bytes=vmem_limit,
        ),
        cost_estimate=cost,
    )(x_mc, params, w_aug)

    return y[:, :c_out].reshape(B, T, num_joints_out, 3)


class TemporalModelBasePallas:
    def __init__(self, num_joints_in, in_features, num_joints_out, filter_widths,
                 dropout, channels, key, hbm_dtype=jnp.float32):
        for fw in filter_widths:
            assert fw % 2 != 0, 'Only odd filter widths are supported'
        assert channels == num_joints_in * in_features, (
            'base class has no expand conv; BN channels must match flattened input')
        self.num_joints_in = num_joints_in
        self.in_features = in_features
        self.num_joints_out = num_joints_out
        self.filter_widths = list(filter_widths)
        self.pad = [filter_widths[0] // 2]
        self.channels = channels
        self.hbm_dtype = hbm_dtype

        c_out = num_joints_out * 3
        self.c_out = c_out
        # Lane-dense output: pad C_out to a 128 multiple only when C >= 128 so the extra
        # output write bytes stay a small fraction of total HBM traffic.
        if c_out % 128 != 0 and channels >= 128:
            self.c_out_pad = 128 * pl.cdiv(c_out, 128)
        else:
            self.c_out_pad = c_out

        k1, k2, k3, k4, kw, kb = jax.random.split(key, 6)
        # expand_bn parameters (eval-mode running statistics)
        self.bn_gamma = jax.random.normal(k1, (channels,), jnp.float32) * 0.1 + 1.0
        self.bn_beta = jax.random.normal(k2, (channels,), jnp.float32) * 0.1
        self.bn_mean = jax.random.normal(k3, (channels,), jnp.float32) * 0.05
        self.bn_var = jnp.abs(jax.random.normal(k4, (channels,), jnp.float32)) * 0.1 + 1.0
        self.bn_eps = 1e-5
        # shrink: Conv1d(channels, num_joints_out*3, kernel_size=1)
        bound = 1.0 / (channels ** 0.5)
        self.shrink_w = jax.random.uniform(kw, (c_out, channels), jnp.float32,
                                           minval=-bound, maxval=bound)
        self.shrink_b = jax.random.uniform(kb, (c_out,), jnp.float32,
                                           minval=-bound, maxval=bound)

        # Precompute (once) the fused BN scale/shift and the transposed weight with the
        # bias folded in as its last row, zero-padded to the lane-dense output width.
        scale = self.bn_gamma / jnp.sqrt(self.bn_var + self.bn_eps)        # (C,)
        shift = self.bn_beta - self.bn_mean * scale                        # (C,)
        self._params = jnp.stack([scale, shift], axis=0)                   # (2, C) f32
        w_aug = jnp.concatenate([self.shrink_w.T, self.shrink_b[None, :]], axis=0)
        if self.c_out_pad > c_out:
            w_aug = jnp.pad(w_aug, ((0, 0), (0, self.c_out_pad - c_out)))
        self._w_aug = w_aug.astype(hbm_dtype)                              # (C+1, Cout_pad)

        self._tile_cap, self._vmem_limit = _tile_policy()

    def receptive_field(self):
        return 1 + 2 * sum(self.pad)

    def forward(self, x):
        # x: (B, T, num_joints_in, in_features)
        assert x.ndim == 4
        assert x.shape[-2] == self.num_joints_in
        assert x.shape[-1] == self.in_features
        M = x.shape[0] * x.shape[1]
        tile_m = _choose_tile_m(M, self.channels, self.c_out_pad,
                                np.dtype(self.hbm_dtype).itemsize,
                                self._tile_cap, self._vmem_limit)
        return _forward_jit(x, self._params, self._w_aug,
                            num_joints_out=self.num_joints_out,
                            c_out_pad=self.c_out_pad, tile_m=tile_m,
                            vmem_limit=self._vmem_limit, hbm_dtype=self.hbm_dtype)


def _reference_forward(model, x):
    # Pure-JAX f32 reference mirroring the original PyTorch forward (with transposes).
    B, T, J, F = x.shape
    xb = jnp.transpose(x.reshape(B, T, J * F), (0, 2, 1))                  # (B, C, T)
    scale = model.bn_gamma / jnp.sqrt(model.bn_var + model.bn_eps)
    shift = model.bn_beta - model.bn_mean * scale
    h = jnp.maximum(xb * scale[None, :, None] + shift[None, :, None], 0.0)
    y = jnp.einsum('oc,bct->bot', model.shrink_w, h) + model.shrink_b[None, :, None]
    return jnp.transpose(y, (0, 2, 1)).reshape(B, -1, model.num_joints_out, 3)


if __name__ == "__main__":
    key = jax.random.PRNGKey(0)
    k_param, k_param2, k_x1, k_x2, k_x3 = jax.random.split(key, 5)

    # --- Toy config (f32 HBM traffic, C=8, C_out=12, no lane padding) ---
    B, T = 2, 16
    num_joints_in, in_features = 4, 2        # C = 8
    num_joints_out = 4                       # C_out = 12
    channels = num_joints_in * in_features

    model = TemporalModelBasePallas(num_joints_in, in_features, num_joints_out,
                                    filter_widths=(1,), dropout=0.25,
                                    channels=channels, key=k_param)

    x = jax.random.normal(k_x1, (B, T, num_joints_in, in_features), jnp.float32)
    out = jax.block_until_ready(model.forward(x))
    ref = _reference_forward(model, x)
    assert out.shape == (B, T, num_joints_out, 3), out.shape
    assert jnp.allclose(out, ref, atol=1e-5, rtol=1e-5), float(jnp.max(jnp.abs(out - ref)))

    # Ragged frames count (M not a multiple of the frames tile): exercises OOB clipping.
    T2 = 13
    x2 = jax.random.normal(k_x2, (B, T2, num_joints_in, in_features), jnp.float32)
    out2 = jax.block_until_ready(model.forward(x2))
    ref2 = _reference_forward(model, x2)
    assert out2.shape == (B, T2, num_joints_out, 3), out2.shape
    assert jnp.allclose(out2, ref2, atol=1e-5, rtol=1e-5), float(jnp.max(jnp.abs(out2 - ref2)))

    # --- Larger config: bf16 HBM traffic + lane-dense padded output (C=256, C_out=51->128) ---
    B3, T3 = 2, 32
    j_in3, f3, j_out3 = 32, 8, 17            # C = 256, C_out = 51
    model_bf16 = TemporalModelBasePallas(j_in3, f3, j_out3, filter_widths=(3,),
                                         dropout=0.25, channels=j_in3 * f3,
                                         key=k_param2, hbm_dtype=jnp.bfloat16)
    x3 = jax.random.normal(k_x3, (B3, T3, j_in3, f3), jnp.float32)
    out3 = jax.block_until_ready(model_bf16.forward(x3))
    ref3 = _reference_forward(model_bf16, x3)
    assert out3.shape == (B3, T3, j_out3, 3), out3.shape
    assert jnp.allclose(out3, ref3, atol=1e-1, rtol=1e-1), float(jnp.max(jnp.abs(out3 - ref3)))

    print("KERNEL_OK")
</pallas_src>

<mosaic_0001>
module attributes {stable_mosaic.version = 11 : i64} {
  func.func @_temporal_base_kernel(%arg0: i32, %arg1: memref<16x8xf32, #tpu.memory_space<vmem>>, %arg2: memref<2x8xf32, #tpu.memory_space<vmem>>, %arg3: memref<9x12xf32, #tpu.memory_space<vmem>>, %arg4: memref<16x12xf32, #tpu.memory_space<vmem>>) attributes {dimension_semantics = [#tpu.dimension_semantics<parallel>], iteration_bounds = array<i64: 2>, scalar_prefetch = 0 : i64, scratch_operands = 0 : i64, tpu.core_type = #tpu.core_type<tc>, window_params = [{transform_indices = @transform_0, window_bounds = array<i64: 16, 8>}, {pipeline_mode = #tpu.pipeline_mode<synchronous>, transform_indices = @transform_1, window_bounds = array<i64: 2, 8>}, {pipeline_mode = #tpu.pipeline_mode<synchronous>, transform_indices = @transform_2, window_bounds = array<i64: 9, 12>}, {transform_indices = @transform_3, window_bounds = array<i64: 16, 12>}]} {
    %c0 = arith.constant 0 : index
    %c0_0 = arith.constant 0 : index
    %0 = vector.load %arg2[%c0, %c0_0] : memref<2x8xf32, #tpu.memory_space<vmem>>, vector<2x8xf32>
    %1 = vector.extract_strided_slice %0 {offsets = [0, 0], sizes = [1, 8], strides = [1, 1]} : vector<2x8xf32> to vector<1x8xf32>
    %2 = vector.extract_strided_slice %0 {offsets = [1, 0], sizes = [1, 8], strides = [1, 1]} : vector<2x8xf32> to vector<1x8xf32>
    %c0_1 = arith.constant 0 : index
    %c0_2 = arith.constant 0 : index
    %3 = vector.load %arg1[%c0_1, %c0_2] : memref<16x8xf32, #tpu.memory_space<vmem>>, vector<16x8xf32>
    %4 = vector.broadcast %1 : vector<1x8xf32> to vector<16x8xf32>
    %5 = arith.mulf %3, %4 : vector<16x8xf32>
    %6 = vector.broadcast %2 : vector<1x8xf32> to vector<16x8xf32>
    %7 = arith.addf %5, %6 : vector<16x8xf32>
    %cst = arith.constant 0.000000e+00 : f32
    %8 = vector.broadcast %cst : f32 to vector<16x8xf32>
    %9 = arith.maximumf %7, %8 : vector<16x8xf32>
    %c0_3 = arith.constant 0 : index
    %c0_4 = arith.constant 0 : index
    %10 = vector.load %arg3[%c0_3, %c0_4] : memref<9x12xf32, #tpu.memory_space<vmem>>, vector<9x12xf32>
    %11 = vector.extract_strided_slice %10 {offsets = [0, 0], sizes = [8, 12], strides = [1, 1]} : vector<9x12xf32> to vector<8x12xf32>
    %cst_5 = arith.constant dense<0.000000e+00> : vector<16x12xf32>
    %12 = tpu.matmul %9, %11, %cst_5 {dimension_numbers = #tpu.dot_dimension_numbers<[1], [0], [0], [1], [0, 0, 1, 1], [], []>} : vector<16x8xf32>, vector<8x12xf32>, vector<16x12xf32> -> vector<16x12xf32>
    %13 = vector.extract_strided_slice %10 {offsets = [8, 0], sizes = [1, 12], strides = [1, 1]} : vector<9x12xf32> to vector<1x12xf32>
    %14 = vector.broadcast %13 : vector<1x12xf32> to vector<16x12xf32>
    %15 = arith.addf %12, %14 : vector<16x12xf32>
    %c0_6 = arith.constant 0 : index
    %c0_7 = arith.constant 0 : index
    %16 = vector.load %arg4[%c0_6, %c0_7] : memref<16x12xf32, #tpu.memory_space<vmem>>, vector<16x12xf32>
    tpu.vector_store %arg4[%c0_6, %c0_7], %15 {strides = array<i32>} : memref<16x12xf32, #tpu.memory_space<vmem>>, vector<16x12xf32>,
    return
  }
  func.func @transform_0(%arg0: i32) -> (i32, i32) {
    %c0_i32 = arith.constant 0 : i32
    %c0_i32_0 = arith.constant 0 : i32
    return %arg0, %c0_i32 : i32, i32
  }
  func.func @transform_1(%arg0: i32) -> (i32, i32) {
    %c0_i32 = arith.constant 0 : i32
    %c0_i32_0 = arith.constant 0 : i32
    %c0_i32_1 = arith.constant 0 : i32
    return %c0_i32, %c0_i32_0 : i32, i32
  }
  func.func @transform_2(%arg0: i32) -> (i32, i32) {
    %c0_i32 = arith.constant 0 : i32
    %c0_i32_0 = arith.constant 0 : i32
    %c0_i32_1 = arith.constant 0 : i32
    return %c0_i32, %c0_i32_0 : i32, i32
  }
  func.func @transform_3(%arg0: i32) -> (i32, i32) {
    %c0_i32 = arith.constant 0 : i32
    %c0_i32_0 = arith.constant 0 : i32
    return %arg0, %c0_i32 : i32, i32
  }
}

</mosaic_0001>

<llo_original>
// kernel: _forward_jit.1
$region0: #{_forward_jit.1}
  #allocation0 [shape = 'u32[]', space=smem, size = 0x4, offset = 0x4, fixed_abs, tag = 'smem constant byte address 0x4 - core index']
  #allocation1 [shape = 'u32[144,128]{1,0:T(1,128)}', space=vmem, size = 0x12000, scoped, tag = 'internal scratch']
  %s0 = inlined_call_operand.vmem [shape: f32[32,8], index: 0, kind: input, shape index: {}]
  %s1 = inlined_call_operand.vmem [shape: f32[2,8], index: 1, kind: input, shape index: {}]
  %s2 = inlined_call_operand.vmem [shape: f32[9,12], index: 2, kind: input, shape index: {}]
  %s3 = inlined_call_operand.vmem [shape: f32[32,12], index: 3, kind: output, shape index: {}]
  %s4 = sld [smem:[#allocation0]]
  $region45: #{_forward_jit.1} parent=0
    _
  %s6 = ssub.s32 1, %s4
  %s7 = scalar_select 0, %s6, %s4
  loop: start=0, step=1, limit=4
  $region2: #{_forward_jit.1} parent=0 // loop_pre_header
    _
  $region3: #{_forward_jit.1} parent=0 // loop_header
    %s9 = sphi 0, %s13
    %p10 = scmp.ge.s32.totalorder %s9, 4
    %s19 = sphi 0, %s21
    %s22 = sphi 0, %s19
    %s23 = sphi 0, %s22
    %s39 = sphi 0, %s23
    %s43 = sphi 0, %s43
    %s45 = sphi 0, %s43
    %s46 = sphi 0, %s45
    %s60 = sphi 0, %s46
    %s64 = sphi 0, %s64
    %s66 = sphi 0, %s64
    %s67 = sphi 0, %s66
    %s81 = sphi 0, %s67
    %s87 = sphi 0, %s89
    %s90 = sphi 0, %s87
    %s91 = sphi 0, %s90
    %s107 = sphi 0, %s91
  $region4: #{_forward_jit.1} parent=0 // loop_header_branch
    %12 = sbr.rel (%p10) target = $region8
  $region5: #{_forward_jit.1} parent=0 // loop_body
    %s14 = ssub.s32 %s9, 1
    %s15 = ssub.s32 %s9, 2
    %s16 = sadd.s32 %s9, 1
    %s17 = ssub.s32 %s9, %s16
    %p18 = scmp.eq.s32.totalorder %s17, 0
    %s20 = sadd.s32 %s19, 1
    %s21 = scalar_select %p18, %s19, %s20
    %p24 = pneg %p18
    %p25 = scmp.eq.s32.totalorder %s9, 1
    %p26 = por %p24, %p25
    %p27 = scmp.ne.s32.totalorder %s19, %s22
    %p28 = scmp.eq.s32.totalorder %s9, 0
    %p29 = por %p27, %p28
    %p30 = scmp.ne.s32.totalorder %s19, %s22
    %p31 = scmp.eq.s32.totalorder %s14, 1
    %p32 = por %p30, %p31
    %p33 = scmp.ne.s32.totalorder %s22, %s23
    %p34 = scmp.eq.s32.totalorder %s14, 0
    %p35 = por %p33, %p34
    %p36 = scmp.ne.s32.totalorder %s22, %s23
    %p37 = scmp.eq.s32.totalorder %s15, 1
    %p38 = por %p36, %p37
    %p40 = scmp.ne.s32.totalorder %s23, %s39
    %p41 = scmp.eq.s32.totalorder %s15, 0
    %p42 = por %p40, %p41
    %s44 = sadd.s32 %s43, 1
    %p47 = scmp.eq.s32.totalorder %s9, 1
    %p48 = scmp.ne.s32.totalorder %s43, %s45
    %p49 = scmp.eq.s32.totalorder %s9, 0
    %p50 = por %p48, %p49
    %p51 = scmp.ne.s32.totalorder %s43, %s45
    %p52 = scmp.eq.s32.totalorder %s14, 1
    %p53 = por %p51, %p52
    %p54 = scmp.ne.s32.totalorder %s45, %s46
    %p55 = scmp.eq.s32.totalorder %s14, 0
    %p56 = por %p54, %p55
    %p57 = scmp.ne.s32.totalorder %s45, %s46
    %p58 = scmp.eq.s32.totalorder %s15, 1
    %p59 = por %p57, %p58
    %p61 = scmp.ne.s32.totalorder %s46, %s60
    %p62 = scmp.eq.s32.totalorder %s15, 0
    %p63 = por %p61, %p62
    %s65 = sadd.s32 %s64, 1
    %p68 = scmp.eq.s32.totalorder %s9, 1
    %p69 = scmp.ne.s32.totalorder %s64, %s66
    %p70 = scmp.eq.s32.totalorder %s9, 0
    %p71 = por %p69, %p70
    %p72 = scmp.ne.s32.totalorder %s64, %s66
    %p73 = scmp.eq.s32.totalorder %s14, 1
    %p74 = por %p72, %p73
    %p75 = scmp.ne.s32.totalorder %s66, %s67
    %p76 = scmp.eq.s32.totalorder %s14, 0
    %p77 = por %p75, %p76
    %p78 = scmp.ne.s32.totalorder %s66, %s67
    %p79 = scmp.eq.s32.totalorder %s15, 1
    %p80 = por %p78, %p79
    %p82 = scmp.ne.s32.totalorder %s67, %s81
    %p83 = scmp.eq.s32.totalorder %s15, 0
    %p84 = por %p82, %p83
    %s85 = ssub.s32 %s9, %s16
    %p86 = scmp.eq.s32.totalorder %s85, 0
    %s88 = sadd.s32 %s87, 1
    %s89 = scalar_select %p86, %s87, %s88
    %p92 = pneg %p86
    %p93 = scmp.eq.s32.totalorder %s9, 1
    %p94 = por %p92, %p93
    %p95 = scmp.ne.s32.totalorder %s87, %s90
    %p96 = scmp.eq.s32.totalorder %s9, 0
    %p97 = por %p95, %p96
    %p98 = scmp.ne.s32.totalorder %s87, %s90
    %p99 = scmp.eq.s32.totalorder %s14, 1
    %p100 = por %p98, %p99
    %p101 = scmp.ne.s32.totalorder %s90, %s91
    %p102 = scmp.eq.s32.totalorder %s14, 0
    %p103 = por %p101, %p102
    %p104 = scmp.ne.s32.totalorder %s90, %s91
    %p105 = scmp.eq.s32.totalorder %s15, 1
    %p106 = por %p104, %p105
    %p108 = scmp.ne.s32.totalorder %s91, %s107
    %p109 = scmp.eq.s32.totalorder %s15, 0
    %p110 = por %p108, %p109
    %p111 = scmp.le.s32.totalorder 1, %s9
    %p112 = scmp.lt.s32.totalorder %s9, 3
    %p113 = pnand %p111, %p112
    %p114 = pneg %p113
    // Predicated region
    $region9: #{_forward_jit.1} parent=5 // pred_check
      _
    $region10: #{_forward_jit.1} parent=5 // pred_check_branch
      %116 = sbr.rel (%p113) target = $region12
    $region11: #{_forward_jit.1} parent=5 // pred_region
      %s117 = ssub.s32 %s9, 1
      // Predicated region
      $region13: #{_forward_jit.1} parent=11 // pred_check
        %p118 = pneg %p56
      $region14: #{_forward_jit.1} parent=11 // pred_check_branch
        %120 = sbr.rel (%p118) target = $region16
      $region15: #{_forward_jit.1} parent=11 // pred_region
        _
      $region16: #{_forward_jit.1} parent=11 // pred_fallthru
        _
      // Predicated region
      $region17: #{_forward_jit.1} parent=11 // pred_check
        %p121 = pneg %p77
      $region18: #{_forward_jit.1} parent=11 // pred_check_branch
        %123 = sbr.rel (%p121) target = $region20
      $region19: #{_forward_jit.1} parent=11 // pred_region
        _
      $region20: #{_forward_jit.1} parent=11 // pred_fallthru
        _
    $region12: #{_forward_jit.1} parent=5 // pred_fallthru
      _
    %p124 = scmp.lt.s32.totalorder %s9, 2
    // Predicated region
    $region21: #{_forward_jit.1} parent=5 // pred_check
      %p125 = pneg %p124
    $region22: #{_forward_jit.1} parent=5 // pred_check_branch
      %127 = sbr.rel (%p125) target = $region24
    $region23: #{_forward_jit.1} parent=5 // pred_region
      // Predicated region
      $region25: #{_forward_jit.1} parent=23 // pred_check
        %p128 = pneg %p29
      $region26: #{_forward_jit.1} parent=23 // pred_check_branch
        %130 = sbr.rel (%p128) target = $region28
      $region27: #{_forward_jit.1} parent=23 // pred_region
        %s131 = smul.u32 2, %s9
        %p132 = scmp.lt.s32.totalorder %s131, 3
        %s133 = scalar_select %p132, %s131, 3
        %s134 = smul.addr %s133, 8
        %s135 = scalar_lea.vmem %s0, %s134
        %s136 = smul.u32 2, %s9
      $region28: #{_forward_jit.1} parent=23 // pred_fallthru
        _
    $region24: #{_forward_jit.1} parent=5 // pred_fallthru
      _
    %p137 = scmp.le.s32.totalorder 1, %s9
    %p138 = scmp.lt.s32.totalorder %s9, 3
    %p139 = pnand %p137, %p138
    %p140 = pneg %p139
    // Predicated region
    $region29: #{_forward_jit.1} parent=5 // pred_check
      _
    $region30: #{_forward_jit.1} parent=5 // pred_check_branch
      %142 = sbr.rel (%p139) target = $region32
    $region31: #{_forward_jit.1} parent=5 // pred_region
      %s143 = ssub.s32 %s9, 1
      %s144 = smul.u32 2, %s14
      %p145 = scmp.lt.s32.totalorder %s144, 3
      %s146 = scalar_select %p145, %s144, 3
      %s147 = smul.addr %s146, 8
      %s148 = scalar_lea.vmem %s0, %s147
      %p149 = pneg %p35
      %p150 = pneg %p32
      %p151 = pneg %p56
      %p152 = pneg %p53
      %p153 = pneg %p77
      %p154 = pneg %p74
      %p155 = pneg %p103
      %p156 = pneg %p100
      %s157 = smul.u32 2, %s14
      %p158 = scmp.lt.s32.totalorder %s157, 3
      %s159 = scalar_select %p158, %s157, 3
      %s160 = smul.addr %s159, 8
      %s161 = scalar_lea.vmem %s3, %s160
      %s162 = smul.u32 2, %s14
      %p163 = scmp.lt.s32.totalorder %s162, 3
      %s164 = scalar_select %p163, %s162, 3
      %s165 = smul.addr %s164, 8
      %s166 = scalar_lea.vmem %s0, %s165
      %s167 = smul.u32 2, %s14
      %s168 = smul.u32 2, %s14
      %p169 = scmp.lt.s32.totalorder %s168, 3
      %s170 = scalar_select %p169, %s168, 3
      %s171 = smul.addr %s170, 8
      %s172 = scalar_lea.vmem %s3, %s171
      %s173 = smul.u32 2, %s14
      %v174 = vld [vmem:[%s1] sm:$0x3]
      %v175 = vld [vmem:[%s166] sm:$0xff]
      %v176 = vld [vmem:[%s166 + $0x8] sm:$0xff]
      %v177 = vlaneseq
      %v178 = vshrl.u32 %v177, 7
      %v179 = vsub.s32 0, %v178
      %v180 = vrot.slane %v174, %v179
      %v181 = vmul.f32 %v175, %v180
      %v182 = vmul.f32 %v176, %v180
      %v183 = vlaneseq
      %v184 = vshrl.u32 %v183, 7
      %v185 = vsub.s32 1, %v184
      %v186 = vrot.slane %v174, %v185
      %v187 = vadd.f32 %v181, %v186
      %v188 = vadd.f32 %v182, %v186
      %v189 = vmax.f32 %v187, 0.0
      %v190 = vmax.f32 %v188, 0.0
      %v191 = vld [vmem:[%s2] sm:$0xff]
      %v192 = vld [vmem:[%s2 + $0x8] sm:$0x1]
      %v193 = vlaneseq
      %v194 = vshrl.u32 %v193, 7
      %v195 = vsub.s32 0, %v194
      %v196 = vrot.slane %v192, %v195
      %vm197 = vcmask 64512
      %v199 = vsel %vm197, %v189, 0
      %v202 = vsel %vm197, %v190, 0
      %204 = vmatprep.subr.mxu0 0.0
      %205 = vmatpush1.msra.mxu0 %v191
      %206 = vmatprep.subr.mxu0 0.0
      %207 = vmatpush1.msra.mxu0 0.0
      %208 = vmatprep.subr.mxu0 0.0
      %209 = vmatpush1.msra.mxu0 0.0
      %210 = vmatprep.subr.mxu0 0.0
      %211 = vmatpush1.msra.mxu0 0.0
      %212 = vmatprep.subr.mxu0 0.0
      %213 = vmatpush1.msra.mxu0 0.0
      %214 = vmatprep.subr.mxu0 0.0
      %215 = vmatpush1.msra.mxu0 0.0
      %216 = vmatprep.subr.mxu0 0.0
      %217 = vmatpush1.msra.mxu0 0.0
      %218 = vmatprep.subr.mxu0 0.0
      %219 = vmatpush1.msra.mxu0 0.0
      %220 = vmatprep.subr.mxu0 0.0
      %221 = vmatpush1.msra.mxu0 0.0
      %222 = vmatprep.subr.mxu0 0.0
      %223 = vmatpush1.msra.mxu0 0.0
      %224 = vmatprep.subr.mxu0 0.0
      %225 = vmatpush1.msra.mxu0 0.0
      %226 = vmatprep.subr.mxu0 0.0
      %227 = vmatpush1.msra.mxu0 0.0
      %228 = vmatprep.subr.mxu0 0.0
      %229 = vmatpush1.msra.mxu0 0.0
      %230 = vmatprep.subr.mxu0 0.0
      %231 = vmatpush1.msra.mxu0 0.0
      %232 = vmatprep.subr.mxu0 0.0
      %233 = vmatpush1.msra.mxu0 0.0
      %234 = vmatprep.subr.mxu0 0.0
      %235 = vmatpush1.msra.mxu0 0.0
      %236 = vmatprep.subr.mxu0 0.0
      %237 = vmatpush1.msra.mxu0 0.0
      %238 = vmatprep.subr.mxu0 0.0
      %239 = vmatpush1.msra.mxu0 0.0
      %240 = vmatprep.subr.mxu0 0.0
      %241 = vmatpush1.msra.mxu0 0.0
      %242 = vmatprep.subr.mxu0 0.0
      %243 = vmatpush1.msra.mxu0 0.0
      %244 = vmatprep.subr.mxu0 0.0
      %245 = vmatpush1.msra.mxu0 0.0
      %246 = vmatprep.subr.mxu0 0.0
      %247 = vmatpush1.msra.mxu0 0.0
      %248 = vmatprep.subr.mxu0 0.0
      %249 = vmatpush1.msra.mxu0 0.0
      %250 = vmatprep.subr.mxu0 0.0
      %251 = vmatpush1.msra.mxu0 0.0
      %252 = vmatprep.subr.mxu0 0.0
      %253 = vmatpush1.msra.mxu0 0.0
      %254 = vmatprep.subr.mxu0 0.0
      %255 = vmatpush1.msra.mxu0 0.0
      %256 = vmatprep.subr.mxu0 0.0
      %257 = vmatpush1.msra.mxu0 0.0
      %258 = vmatprep.subr.mxu0 0.0
      %259 = vmatpush1.msra.mxu0 0.0
      %260 = vmatprep.subr.mxu0 0.0
      %261 = vmatpush1.msra.mxu0 0.0
      %262 = vmatprep.subr.mxu0 0.0
      %263 = vmatpush1.msra.mxu0 0.0
      %264 = vmatprep.subr.mxu0 0.0
      %265 = vmatpush1.msra.mxu0 0.0
      %266 = vmatprep.subr.mxu0 0.0
      %267 = vmatpush1.msra.mxu0 0.0
      %268 = vmatprep.mubr.f32.mxu0 0.0
      %269 = vmatmul.mubr.f32.gmra.mrb[0].mxu0 %v199
      %v270 = vpop.f32.mrb[0].mxu0
      %v271 = vadd.f32 %v196, %v270
      %v272 = vpop.f32.mrb[0].mxu0
      %273 = vmatprep.mubr.f32.mxu0 0.0
      %274 = vmatmul.mubr.f32.gmra.mrb[0].mxu0 %v202
      %v275 = vpop.f32.mrb[0].mxu0
      %v276 = vadd.f32 %v196, %v275
      %v277 = vpop.f32.mrb[0].mxu0
      %278 = vdwg.mxu0
      %vm279 = vcmask 97280
      %280 = vst.msk [vmem:[%s172] sm:$0xff] %vm279, %v271
      %281 = vst.msk [vmem:[%s172 + $0x8] sm:$0xff] %vm279, %v276
      %s282 = smul.u32 2, %s14
      %p283 = scmp.lt.s32.totalorder %s282, 3
      %s284 = scalar_select %p283, %s282, 3
      %s285 = smul.addr %s284, 8
      %s286 = scalar_lea.vmem %s3, %s285
      // Predicated region
      $region33: #{_forward_jit.1} parent=31 // pred_check
        %p287 = pneg %p100
      $region34: #{_forward_jit.1} parent=31 // pred_check_branch
        %289 = sbr.rel (%p287) target = $region36
      $region35: #{_forward_jit.1} parent=31 // pred_region
        %s290 = smul.u32 2, %s14
      $region36: #{_forward_jit.1} parent=31 // pred_fallthru
        _
    $region32: #{_forward_jit.1} parent=5 // pred_fallthru
      _
    %p291 = scmp.le.s32.totalorder 2, %s9
    // Predicated region
    $region37: #{_forward_jit.1} parent=5 // pred_check
      %p292 = pneg %p291
    $region38: #{_forward_jit.1} parent=5 // pred_check_branch
      %294 = sbr.rel (%p292) target = $region40
    $region39: #{_forward_jit.1} parent=5 // pred_region
      %s295 = ssub.s32 %s9, 2
      // Predicated region
      $region41: #{_forward_jit.1} parent=39 // pred_check
        %p296 = pneg %p106
      $region42: #{_forward_jit.1} parent=39 // pred_check_branch
        %298 = sbr.rel (%p296) target = $region44
      $region43: #{_forward_jit.1} parent=39 // pred_region
        %s299 = smul.u32 2, %s15
        %p300 = scmp.lt.s32.totalorder %s299, 3
        %s301 = scalar_select %p300, %s299, 3
        %s302 = smul.addr %s301, 8
        %s303 = scalar_lea.vmem %s3, %s302
      $region44: #{_forward_jit.1} parent=39 // pred_fallthru
        _
    $region40: #{_forward_jit.1} parent=5 // pred_fallthru
      _
  $region6: #{_forward_jit.1} parent=0 // loop_footer
    %s13 = sadd.s32 1, %s9
  $region7: #{_forward_jit.1} parent=0 // loop_footer_branch
    %8 = sbr.rel target = $region3
  $region8: #{_forward_jit.1} parent=0 // loop_exit
    _

</llo_original>
